<compile_context>
chip_gen: v5e
topology: v5e:2x2
jax: 0.10.0
libtpu: 0.0.40
codegen_flags: <defaults>
</compile_context>

<pallas_src>
import math
from functools import partial

import jax
import jax.numpy as jnp
import numpy as np
from jax.experimental import pallas as pl
from jax.experimental.pallas import tpu as pltpu

LN_EPS = 1e-5  # torch.nn.LayerNorm default eps


# ---------------------------------------------------------------------------
# Kernel
# ---------------------------------------------------------------------------
def actor_kernel(obs_ref, wt_ref, bt_ref, g_ref, be_ref,
                 w1_ref, b1_ref, w2_ref, b2_ref, w3_ref, b3_ref,
                 out_ref, *, ea):
    md = wt_ref.dtype  # matmul operand dtype (bf16 or f32)

    # ---- trunk: Linear -> LayerNorm -> Tanh (f32 accumulate, f32 elementwise) ----
    x = jnp.dot(obs_ref[...], wt_ref[...],
                preferred_element_type=jnp.float32) + bt_ref[...]
    mu = jnp.mean(x, axis=-1, keepdims=True)
    var = jnp.mean((x - mu) ** 2, axis=-1, keepdims=True)     # biased var (torch LN)
    x = (x - mu) * jax.lax.rsqrt(var + LN_EPS)
    x = jnp.tanh(x * g_ref[...] + be_ref[...])

    # ---- Pi_head: ensemble fused along lanes (one matmul per layer) ----
    h = jnp.dot(x.astype(md), w1_ref[...],
                preferred_element_type=jnp.float32) + b1_ref[...]
    h = jnp.maximum(h, 0.0)
    h = jnp.dot(h.astype(md), w2_ref[...],
                preferred_element_type=jnp.float32) + b2_ref[...]
    h = jnp.maximum(h, 0.0)
    o = jnp.dot(h.astype(md), w3_ref[...],
                preferred_element_type=jnp.float32) + b3_ref[...]

    # Columns [0, ea) are means (tanh), [ea, 2*ea) are log-stds (exp), [2*ea, 128*k) are pad.
    # Selected with an iota mask -> no partial-lane slicing inside the kernel.
    # TODO(synk): if E*A ever reaches >=128, switch to lane-aligned slices (or two output
    # refs) instead of evaluating both tanh and exp over the full slab.
    col = jax.lax.broadcasted_iota(jnp.int32, o.shape, 1)
    out_ref[...] = jnp.where(col < ea, jnp.tanh(o), jnp.exp(o))


# ---------------------------------------------------------------------------
# Wrapper
# ---------------------------------------------------------------------------
def _vmem_limit_bytes():
    """Per-generation scoped VMEM limit (≈48 MiB on v7x, ≈96 MiB capped at 100 MiB on v5e/v6e)."""
    cap = 64 * 1024 * 1024  # conservative fallback = v7x physical VMEM per TensorCore
    try:
        cap = int(getattr(pltpu.get_tpu_info(), "vmem_capacity_bytes", cap))
    except Exception:
        pass
    return min(int(cap * 3 // 4), 100 * 1024 * 1024)


@partial(jax.jit, static_argnums=(2, 3))
def ensemble_gaussian_actor_forward(obs, packed_params, ensemble_size, action_dim):
    """Returns (mean, stddev), each (B, ensemble_size, action_dim) float32."""
    wt, bt, g, be, w1f, b1f, w2f, b2f, w3f, b3f = packed_params
    params_all = (wt, bt, g, be, w1f, b1f, w2f, b2f, w3f, b3f)
    B = obs.shape[0]
    in_dim = wt.shape[0]
    E, A = ensemble_size, action_dim
    ea = E * A
    out_pad = w3f.shape[-1]  # 128-lane-padded output width

    # flatten NCHW row-major, exactly like torch .view(B, -1); fused into this jit with the call
    obs_flat = obs.reshape(B, -1).astype(wt.dtype)

    # ---- per-generation VMEM budget -> batch tile ----
    vmem_limit = _vmem_limit_bytes()
    # resident weights keep 2 pipeline buffers each (constant index_map skips re-DMA but still
    # reserves double buffers); obs/out tiles are double-buffered per grid step.
    weight_bytes = 2 * sum(int(np.prod(a.shape)) * a.dtype.itemsize for a in params_all)
    per_row_bytes = 2 * (in_dim * obs_flat.dtype.itemsize + out_pad * 4)
    budget = vmem_limit - weight_bytes - (2 << 20)            # 2 MiB headroom for internal scratch
    tile_cap = max(16, (budget // per_row_bytes) // 16 * 16)

    if B <= 16:
        tile_b = B                                            # full-dim block (any B is legal)
    else:
        tile_b = min(1024, int(tile_cap), ((B + 15) // 16) * 16)  # mult of 16: bf16 row packing
        if B <= tile_b:
            # keep >= 2 grid steps so the 'parallel' batch axis can shard across v7x's 2 TCs
            tile_b = min(tile_b, max(16, (((B + 1) // 2) + 15) // 16 * 16))
        tile_b = max(16, tile_b)

    grid = (pl.cdiv(B, tile_b),)  # no host-side pad: trailing partial block is masked by Pallas

    def resident(arr):  # full-array block, constant index_map -> stays VMEM-resident
        return pl.BlockSpec(arr.shape, lambda i: (0, 0))

    out = pl.pallas_call(
        partial(actor_kernel, ea=ea),
        out_shape=jax.ShapeDtypeStruct((B, out_pad), jnp.float32),
        grid=grid,
        in_specs=[
            pl.BlockSpec((tile_b, in_dim), lambda i: (i, 0)),     # obs: tiled over batch
            resident(wt), resident(bt), resident(g), resident(be),
            resident(w1f), resident(b1f),
            resident(w2f), resident(b2f),
            resident(w3f), resident(b3f),
        ],
        out_specs=pl.BlockSpec((tile_b, out_pad), lambda i: (i, 0)),
        compiler_params=pltpu.CompilerParams(
            dimension_semantics=("parallel",),   # megacore-shardable batch axis (v7x)
            vmem_limit_bytes=vmem_limit,
        ),
    )(obs_flat, *params_all)

    mean = out[:, :ea].reshape(B, E, A)          # PyTorch layout (B, E, A)
    std = out[:, ea:2 * ea].reshape(B, E, A)
    return mean, std


# ---------------------------------------------------------------------------
# Parameters: PyTorch-like per-member params + host-side packing for the kernel
# ---------------------------------------------------------------------------
def init_params(key, repr_shape, trunk_dim, hidden_dim, action_dim, ensemble_size=2):
    in_dim = math.prod(repr_shape)
    out_dim = 2 * action_dim  # stddev_schedule is None -> action_dim * 2
    ks = jax.random.split(key, 8)

    def lin(k, fan_in, shape):
        return jax.random.normal(k, shape, jnp.float32) / math.sqrt(fan_in)

    wt = lin(ks[0], in_dim, (in_dim, trunk_dim))
    bt = lin(ks[1], in_dim, (1, trunk_dim))
    g = jnp.ones((1, trunk_dim), jnp.float32)      # LayerNorm weight
    be = jnp.zeros((1, trunk_dim), jnp.float32)    # LayerNorm bias
    w1 = lin(ks[2], trunk_dim, (ensemble_size, trunk_dim, hidden_dim))
    b1 = lin(ks[3], trunk_dim, (ensemble_size, 1, hidden_dim))
    w2 = lin(ks[4], hidden_dim, (ensemble_size, hidden_dim, hidden_dim))
    b2 = lin(ks[5], hidden_dim, (ensemble_size, 1, hidden_dim))
    w3 = lin(ks[6], hidden_dim, (ensemble_size, hidden_dim, out_dim))
    b3 = lin(ks[7], hidden_dim, (ensemble_size, 1, out_dim))
    return (wt, bt, g, be, w1, b1, w2, b2, w3, b3)


def pack_params(params, matmul_dtype=jnp.bfloat16):
    """Fuse the ensemble along the lane axis, reorder output columns to
    [all means | all log-stds], and zero-pad the output width to a 128-lane slab.
    Biases / LN params stay f32 (added after f32 accumulate)."""
    wt, bt, g, be, w1, b1, w2, b2, w3, b3 = params
    E, T, H = w1.shape
    A = w3.shape[-1] // 2
    out_pad = ((2 * E * A + 127) // 128) * 128   # lane-dense unmasked output stores

    # layer 1: (T, E*H)
    w1f = jnp.concatenate([w1[e] for e in range(E)], axis=-1)
    b1f = jnp.concatenate([b1[e] for e in range(E)], axis=-1)

    # layer 2: block-diagonal (E*H, E*H)
    # TODO(synk): block-diag fusion wastes E x the needed columns once E*H exceeds the MXU
    # width (128 on v5e, 256 on v6e/v7x); switch layers 2/3 to per-member dots in that regime.
    w2f = jnp.zeros((E * H, E * H), jnp.float32)
    for e in range(E):
        w2f = w2f.at[e * H:(e + 1) * H, e * H:(e + 1) * H].set(w2[e])
    b2f = jnp.concatenate([b2[e] for e in range(E)], axis=-1)

    # layer 3: block structure, columns [mean_e0..mean_e{E-1} | std_e0..std_e{E-1} | 0-pad]
    w3f = jnp.zeros((E * H, out_pad), jnp.float32)
    b3f = jnp.zeros((1, out_pad), jnp.float32)
    for e in range(E):
        w3f = w3f.at[e * H:(e + 1) * H, e * A:(e + 1) * A].set(w3[e][:, :A])
        w3f = w3f.at[e * H:(e + 1) * H, E * A + e * A:E * A + (e + 1) * A].set(w3[e][:, A:])
        b3f = b3f.at[:, e * A:(e + 1) * A].set(b3[e][:, :A])
        b3f = b3f.at[:, E * A + e * A:E * A + (e + 1) * A].set(b3[e][:, A:])

    md = matmul_dtype
    return (wt.astype(md), bt, g, be,
            w1f.astype(md), b1f, w2f.astype(md), b2f, w3f.astype(md), b3f)


# ---------------------------------------------------------------------------
# Pure-JAX f32 reference (matches the PyTorch module's math)
# ---------------------------------------------------------------------------
def reference_forward(obs, params):
    wt, bt, g, be, w1, b1, w2, b2, w3, b3 = params
    B = obs.shape[0]
    x = obs.reshape(B, -1).astype(jnp.float32)
    x = x @ wt + bt
    mu = jnp.mean(x, axis=-1, keepdims=True)
    var = jnp.mean((x - mu) ** 2, axis=-1, keepdims=True)
    x = (x - mu) / jnp.sqrt(var + LN_EPS) * g + be
    x = jnp.tanh(x)
    means, stds = [], []
    A = w3.shape[-1] // 2
    for e in range(w1.shape[0]):
        h = jnp.maximum(x @ w1[e] + b1[e], 0.0)
        h = jnp.maximum(h @ w2[e] + b2[e], 0.0)
        o = h @ w3[e] + b3[e]
        means.append(jnp.tanh(o[:, :A]))
        stds.append(jnp.exp(o[:, A:]))
    return jnp.stack(means, axis=1), jnp.stack(stds, axis=1)


if __name__ == "__main__":
    # small, forward-consistent shapes
    repr_shape = (4, 16, 16)   # conv-style representation, flattened by the trunk
    B, trunk_dim, hidden_dim, action_dim, ensemble_size = 2, 32, 32, 4, 2

    key = jax.random.PRNGKey(0)
    k_obs, k_obs2, k_par = jax.random.split(key, 3)
    obs = jax.random.normal(k_obs, (B,) + repr_shape, jnp.float32)   # NCHW, like PyTorch
    params = init_params(k_par, repr_shape, trunk_dim, hidden_dim,
                         action_dim, ensemble_size)

    ref_mean, ref_std = reference_forward(obs, params)

    # 1) structural correctness check with f32 matmul operands (tight tolerance)
    packed_f32 = pack_params(params, matmul_dtype=jnp.float32)
    mean32, std32 = ensemble_gaussian_actor_forward(obs, packed_f32,
                                                    ensemble_size, action_dim)
    jax.block_until_ready((mean32, std32))
    assert mean32.shape == (B, ensemble_size, action_dim)
    assert std32.shape == (B, ensemble_size, action_dim)
    np.testing.assert_allclose(np.asarray(mean32), np.asarray(ref_mean), rtol=2e-3, atol=2e-3)
    np.testing.assert_allclose(np.asarray(std32), np.asarray(ref_std), rtol=2e-3, atol=2e-3)

    # 2) production path: bf16 matmul operands (MXU-native), f32 elementwise
    packed_bf16 = pack_params(params, matmul_dtype=jnp.bfloat16)
    mean, std = ensemble_gaussian_actor_forward(obs, packed_bf16,
                                                ensemble_size, action_dim)
    jax.block_until_ready((mean, std))
    np.testing.assert_allclose(np.asarray(mean), np.asarray(ref_mean), rtol=3e-2, atol=3e-2)
    np.testing.assert_allclose(np.asarray(std), np.asarray(ref_std), rtol=3e-2, atol=3e-2)

    # 3) multi-step grid + masked trailing partial block (no host-side pad), odd batch
    B2 = 37
    obs2 = jax.random.normal(k_obs2, (B2,) + repr_shape, jnp.float32)
    ref_mean2, ref_std2 = reference_forward(obs2, params)
    mean2, std2 = ensemble_gaussian_actor_forward(obs2, packed_f32,
                                                  ensemble_size, action_dim)
    jax.block_until_ready((mean2, std2))
    assert mean2.shape == (B2, ensemble_size, action_dim)
    np.testing.assert_allclose(np.asarray(mean2), np.asarray(ref_mean2), rtol=2e-3, atol=2e-3)
    np.testing.assert_allclose(np.asarray(std2), np.asarray(ref_std2), rtol=2e-3, atol=2e-3)

    print("KERNEL_OK")
</pallas_src>

<mosaic_0001>
module attributes {stable_mosaic.version = 11 : i64} {
  func.func @actor_kernel(%arg0: i32, %arg1: memref<2x1024xf32, #tpu.memory_space<vmem>>, %arg2: memref<1024x32xf32, #tpu.memory_space<vmem>>, %arg3: memref<1x32xf32, #tpu.memory_space<vmem>>, %arg4: memref<1x32xf32, #tpu.memory_space<vmem>>, %arg5: memref<1x32xf32, #tpu.memory_space<vmem>>, %arg6: memref<32x64xf32, #tpu.memory_space<vmem>>, %arg7: memref<1x64xf32, #tpu.memory_space<vmem>>, %arg8: memref<64x64xf32, #tpu.memory_space<vmem>>, %arg9: memref<1x64xf32, #tpu.memory_space<vmem>>, %arg10: memref<64x128xf32, #tpu.memory_space<vmem>>, %arg11: memref<1x128xf32, #tpu.memory_space<vmem>>, %arg12: memref<2x128xf32, #tpu.memory_space<vmem>>) attributes {dimension_semantics = [#tpu.dimension_semantics<parallel>], iteration_bounds = array<i64: 1>, scalar_prefetch = 0 : i64, scratch_operands = 0 : i64, tpu.core_type = #tpu.core_type<tc>, window_params = [{transform_indices = @transform_0, window_bounds = array<i64: 2, 1024>}, {pipeline_mode = #tpu.pipeline_mode<synchronous>, transform_indices = @transform_1, window_bounds = array<i64: 1024, 32>}, {pipeline_mode = #tpu.pipeline_mode<synchronous>, transform_indices = @transform_2, window_bounds = array<i64: 1, 32>}, {pipeline_mode = #tpu.pipeline_mode<synchronous>, transform_indices = @transform_3, window_bounds = array<i64: 1, 32>}, {pipeline_mode = #tpu.pipeline_mode<synchronous>, transform_indices = @transform_4, window_bounds = array<i64: 1, 32>}, {pipeline_mode = #tpu.pipeline_mode<synchronous>, transform_indices = @transform_5, window_bounds = array<i64: 32, 64>}, {pipeline_mode = #tpu.pipeline_mode<synchronous>, transform_indices = @transform_6, window_bounds = array<i64: 1, 64>}, {pipeline_mode = #tpu.pipeline_mode<synchronous>, transform_indices = @transform_7, window_bounds = array<i64: 64, 64>}, {pipeline_mode = #tpu.pipeline_mode<synchronous>, transform_indices = @transform_8, window_bounds = array<i64: 1, 64>}, {pipeline_mode = #tpu.pipeline_mode<synchronous>, transform_indices = @transform_9, window_bounds = array<i64: 64, 128>}, {pipeline_mode = #tpu.pipeline_mode<synchronous>, transform_indices = @transform_10, window_bounds = array<i64: 1, 128>}, {transform_indices = @transform_11, window_bounds = array<i64: 2, 128>}]} {
    %c0 = arith.constant 0 : index
    %c0_0 = arith.constant 0 : index
    %0 = vector.load %arg1[%c0, %c0_0] : memref<2x1024xf32, #tpu.memory_space<vmem>>, vector<2x1024xf32>
    %c0_1 = arith.constant 0 : index
    %c0_2 = arith.constant 0 : index
    %1 = vector.load %arg2[%c0_1, %c0_2] : memref<1024x32xf32, #tpu.memory_space<vmem>>, vector<1024x32xf32>
    %cst = arith.constant dense<0.000000e+00> : vector<2x32xf32>
    %2 = tpu.matmul %0, %1, %cst {dimension_numbers = #tpu.dot_dimension_numbers<[1], [0], [0], [1], [0, 0, 1, 1], [], []>} : vector<2x1024xf32>, vector<1024x32xf32>, vector<2x32xf32> -> vector<2x32xf32>
    %c0_3 = arith.constant 0 : index
    %c0_4 = arith.constant 0 : index
    %3 = vector.load %arg3[%c0_3, %c0_4] : memref<1x32xf32, #tpu.memory_space<vmem>>, vector<1x32xf32>
    %4 = vector.broadcast %3 : vector<1x32xf32> to vector<2x32xf32>
    %5 = arith.addf %2, %4 : vector<2x32xf32>
    %cst_5 = arith.constant dense<0.000000e+00> : vector<2xf32>
    %6 = vector.multi_reduction <add>, %5, %cst_5 [1] : vector<2x32xf32> to vector<2xf32>
    %7 = vector.shape_cast %6 : vector<2xf32> to vector<2x1xf32>
    %cst_6 = arith.constant 3.200000e+01 : f32
    %8 = vector.broadcast %cst_6 : f32 to vector<2x1xf32>
    %9 = arith.divf %7, %8 : vector<2x1xf32>
    %10 = vector.broadcast %9 : vector<2x1xf32> to vector<2x32xf32>
    %11 = arith.subf %5, %10 : vector<2x32xf32>
    %12 = arith.mulf %11, %11 : vector<2x32xf32>
    %cst_7 = arith.constant dense<0.000000e+00> : vector<2xf32>
    %13 = vector.multi_reduction <add>, %12, %cst_7 [1] : vector<2x32xf32> to vector<2xf32>
    %14 = vector.shape_cast %13 : vector<2xf32> to vector<2x1xf32>
    %cst_8 = arith.constant 3.200000e+01 : f32
    %15 = vector.broadcast %cst_8 : f32 to vector<2x1xf32>
    %16 = arith.divf %14, %15 : vector<2x1xf32>
    %17 = vector.broadcast %9 : vector<2x1xf32> to vector<2x32xf32>
    %18 = arith.subf %5, %17 : vector<2x32xf32>
    %cst_9 = arith.constant 9.99999974E-6 : f32
    %19 = vector.broadcast %cst_9 : f32 to vector<2x1xf32>
    %20 = arith.addf %16, %19 : vector<2x1xf32>
    %21 = math.rsqrt %20 : vector<2x1xf32>
    %22 = vector.broadcast %21 : vector<2x1xf32> to vector<2x32xf32>
    %23 = arith.mulf %18, %22 : vector<2x32xf32>
    %c0_10 = arith.constant 0 : index
    %c0_11 = arith.constant 0 : index
    %24 = vector.load %arg4[%c0_10, %c0_11] : memref<1x32xf32, #tpu.memory_space<vmem>>, vector<1x32xf32>
    %25 = vector.broadcast %24 : vector<1x32xf32> to vector<2x32xf32>
    %26 = arith.mulf %23, %25 : vector<2x32xf32>
    %c0_12 = arith.constant 0 : index
    %c0_13 = arith.constant 0 : index
    %27 = vector.load %arg5[%c0_12, %c0_13] : memref<1x32xf32, #tpu.memory_space<vmem>>, vector<1x32xf32>
    %28 = vector.broadcast %27 : vector<1x32xf32> to vector<2x32xf32>
    %29 = arith.addf %26, %28 : vector<2x32xf32>
    %30 = math.tanh %29 : vector<2x32xf32>
    %c0_14 = arith.constant 0 : index
    %c0_15 = arith.constant 0 : index
    %31 = vector.load %arg6[%c0_14, %c0_15] : memref<32x64xf32, #tpu.memory_space<vmem>>, vector<32x64xf32>
    %cst_16 = arith.constant dense<0.000000e+00> : vector<2x64xf32>
    %32 = tpu.matmul %30, %31, %cst_16 {dimension_numbers = #tpu.dot_dimension_numbers<[1], [0], [0], [1], [0, 0, 1, 1], [], []>} : vector<2x32xf32>, vector<32x64xf32>, vector<2x64xf32> -> vector<2x64xf32>
    %c0_17 = arith.constant 0 : index
    %c0_18 = arith.constant 0 : index
    %33 = vector.load %arg7[%c0_17, %c0_18] : memref<1x64xf32, #tpu.memory_space<vmem>>, vector<1x64xf32>
    %34 = vector.broadcast %33 : vector<1x64xf32> to vector<2x64xf32>
    %35 = arith.addf %32, %34 : vector<2x64xf32>
    %cst_19 = arith.constant 0.000000e+00 : f32
    %36 = vector.broadcast %cst_19 : f32 to vector<2x64xf32>
    %37 = arith.maximumf %35, %36 : vector<2x64xf32>
    %c0_20 = arith.constant 0 : index
    %c0_21 = arith.constant 0 : index
    %38 = vector.load %arg8[%c0_20, %c0_21] : memref<64x64xf32, #tpu.memory_space<vmem>>, vector<64x64xf32>
    %cst_22 = arith.constant dense<0.000000e+00> : vector<2x64xf32>
    %39 = tpu.matmul %37, %38, %cst_22 {dimension_numbers = #tpu.dot_dimension_numbers<[1], [0], [0], [1], [0, 0, 1, 1], [], []>} : vector<2x64xf32>, vector<64x64xf32>, vector<2x64xf32> -> vector<2x64xf32>
    %c0_23 = arith.constant 0 : index
    %c0_24 = arith.constant 0 : index
    %40 = vector.load %arg9[%c0_23, %c0_24] : memref<1x64xf32, #tpu.memory_space<vmem>>, vector<1x64xf32>
    %41 = vector.broadcast %40 : vector<1x64xf32> to vector<2x64xf32>
    %42 = arith.addf %39, %41 : vector<2x64xf32>
    %cst_25 = arith.constant 0.000000e+00 : f32
    %43 = vector.broadcast %cst_25 : f32 to vector<2x64xf32>
    %44 = arith.maximumf %42, %43 : vector<2x64xf32>
    %c0_26 = arith.constant 0 : index
    %c0_27 = arith.constant 0 : index
    %45 = vector.load %arg10[%c0_26, %c0_27] : memref<64x128xf32, #tpu.memory_space<vmem>>, vector<64x128xf32>
    %cst_28 = arith.constant dense<0.000000e+00> : vector<2x128xf32>
    %46 = tpu.matmul %44, %45, %cst_28 {dimension_numbers = #tpu.dot_dimension_numbers<[1], [0], [0], [1], [0, 0, 1, 1], [], []>} : vector<2x64xf32>, vector<64x128xf32>, vector<2x128xf32> -> vector<2x128xf32>
    %c0_29 = arith.constant 0 : index
    %c0_30 = arith.constant 0 : index
    %47 = vector.load %arg11[%c0_29, %c0_30] : memref<1x128xf32, #tpu.memory_space<vmem>>, vector<1x128xf32>
    %48 = vector.broadcast %47 : vector<1x128xf32> to vector<2x128xf32>
    %49 = arith.addf %46, %48 : vector<2x128xf32>
    %50 = tpu.iota {dimensions = array<i32: 1>} : vector<2x128xi32>
    %c8_i32 = arith.constant 8 : i32
    %51 = vector.broadcast %c8_i32 : i32 to vector<2x128xi32>
    %52 = arith.cmpi slt, %50, %51 : vector<2x128xi32>
    %53 = math.tanh %49 : vector<2x128xf32>
    %54 = math.exp %49 : vector<2x128xf32>
    %55 = arith.select %52, %53, %54 : vector<2x128xi1>, vector<2x128xf32>
    %c0_31 = arith.constant 0 : index
    %c0_32 = arith.constant 0 : index
    %56 = vector.load %arg12[%c0_31, %c0_32] : memref<2x128xf32, #tpu.memory_space<vmem>>, vector<2x128xf32>
    tpu.vector_store %arg12[%c0_31, %c0_32], %55 {strides = array<i32>} : memref<2x128xf32, #tpu.memory_space<vmem>>, vector<2x128xf32>,
    return
  }
  func.func @transform_0(%arg0: i32) -> (i32, i32) {
    %c0_i32 = arith.constant 0 : i32
    %c0_i32_0 = arith.constant 0 : i32
    return %arg0, %c0_i32 : i32, i32
  }
  func.func @transform_1(%arg0: i32) -> (i32, i32) {
    %c0_i32 = arith.constant 0 : i32
    %c0_i32_0 = arith.constant 0 : i32
    %c0_i32_1 = arith.constant 0 : i32
    return %c0_i32, %c0_i32_0 : i32, i32
  }
  func.func @transform_2(%arg0: i32) -> (i32, i32) {
    %c0_i32 = arith.constant 0 : i32
    %c0_i32_0 = arith.constant 0 : i32
    %c0_i32_1 = arith.constant 0 : i32
    return %c0_i32, %c0_i32_0 : i32, i32
  }
  func.func @transform_3(%arg0: i32) -> (i32, i32) {
    %c0_i32 = arith.constant 0 : i32
    %c0_i32_0 = arith.constant 0 : i32
    %c0_i32_1 = arith.constant 0 : i32
    return %c0_i32, %c0_i32_0 : i32, i32
  }
  func.func @transform_4(%arg0: i32) -> (i32, i32) {
    %c0_i32 = arith.constant 0 : i32
    %c0_i32_0 = arith.constant 0 : i32
    %c0_i32_1 = arith.constant 0 : i32
    return %c0_i32, %c0_i32_0 : i32, i32
  }
  func.func @transform_5(%arg0: i32) -> (i32, i32) {
    %c0_i32 = arith.constant 0 : i32
    %c0_i32_0 = arith.constant 0 : i32
    %c0_i32_1 = arith.constant 0 : i32
    return %c0_i32, %c0_i32_0 : i32, i32
  }
  func.func @transform_6(%arg0: i32) -> (i32, i32) {
    %c0_i32 = arith.constant 0 : i32
    %c0_i32_0 = arith.constant 0 : i32
    %c0_i32_1 = arith.constant 0 : i32
    return %c0_i32, %c0_i32_0 : i32, i32
  }
  func.func @transform_7(%arg0: i32) -> (i32, i32) {
    %c0_i32 = arith.constant 0 : i32
    %c0_i32_0 = arith.constant 0 : i32
    %c0_i32_1 = arith.constant 0 : i32
    return %c0_i32, %c0_i32_0 : i32, i32
  }
  func.func @transform_8(%arg0: i32) -> (i32, i32) {
    %c0_i32 = arith.constant 0 : i32
    %c0_i32_0 = arith.constant 0 : i32
    %c0_i32_1 = arith.constant 0 : i32
    return %c0_i32, %c0_i32_0 : i32, i32
  }
  func.func @transform_9(%arg0: i32) -> (i32, i32) {
    %c0_i32 = arith.constant 0 : i32
    %c0_i32_0 = arith.constant 0 : i32
    %c0_i32_1 = arith.constant 0 : i32
    return %c0_i32, %c0_i32_0 : i32, i32
  }
  func.func @transform_10(%arg0: i32) -> (i32, i32) {
    %c0_i32 = arith.constant 0 : i32
    %c0_i32_0 = arith.constant 0 : i32
    %c0_i32_1 = arith.constant 0 : i32
    return %c0_i32, %c0_i32_0 : i32, i32
  }
  func.func @transform_11(%arg0: i32) -> (i32, i32) {
    %c0_i32 = arith.constant 0 : i32
    %c0_i32_0 = arith.constant 0 : i32
    return %arg0, %c0_i32 : i32, i32
  }
}

</mosaic_0001>

<llo_original>
// kernel: ensemble_gaussian_actor_forward.1
$region0: #{ensemble_gaussian_actor_forward.1}
  #allocation0 [shape = 'u32[]', space=smem, size = 0x4, offset = 0x4, fixed_abs, tag = 'smem constant byte address 0x4 - core index']
  #allocation1 [shape = 'u32[72,128]{1,0:T(1,128)}', space=vmem, size = 0x9000, scoped, tag = 'internal scratch']
  %s0 = inlined_call_operand.vmem [shape: f32[2,1024], index: 0, kind: input, shape index: {}]
  %s1 = inlined_call_operand.vmem [shape: f32[1024,32], index: 1, kind: input, shape index: {}]
  %s2 = inlined_call_operand.vmem [shape: f32[1,32], index: 2, kind: input, shape index: {}]
  %s3 = inlined_call_operand.vmem [shape: f32[1,32], index: 3, kind: input, shape index: {}]
  %s4 = inlined_call_operand.vmem [shape: f32[1,32], index: 4, kind: input, shape index: {}]
  %s5 = inlined_call_operand.vmem [shape: f32[32,64], index: 5, kind: input, shape index: {}]
  %s6 = inlined_call_operand.vmem [shape: f32[1,64], index: 6, kind: input, shape index: {}]
  %s7 = inlined_call_operand.vmem [shape: f32[64,64], index: 7, kind: input, shape index: {}]
  %s8 = inlined_call_operand.vmem [shape: f32[1,64], index: 8, kind: input, shape index: {}]
  %s9 = inlined_call_operand.vmem [shape: f32[64,128], index: 9, kind: input, shape index: {}]
  %s10 = inlined_call_operand.vmem [shape: f32[1,128], index: 10, kind: input, shape index: {}]
  %s11 = inlined_call_operand.vmem [shape: f32[2,128], index: 11, kind: output, shape index: {}]
  %s12 = sld [smem:[#allocation0]]
  $region54: #{ensemble_gaussian_actor_forward.1} parent=0
    _
  %s14 = ssub.s32 1, %s12
  %s15 = scalar_select 0, %s14, %s12
  // Predicated region
  $region2: #{ensemble_gaussian_actor_forward.1} parent=0 // pred_check
    _
  $region3: #{ensemble_gaussian_actor_forward.1} parent=0 // pred_check_branch
    %17 = sbr.rel (0) target = $region5
  $region4: #{ensemble_gaussian_actor_forward.1} parent=0 // pred_region
    _
  $region5: #{ensemble_gaussian_actor_forward.1} parent=0 // pred_fallthru
    _
  // Predicated region
  $region6: #{ensemble_gaussian_actor_forward.1} parent=0 // pred_check
    _
  $region7: #{ensemble_gaussian_actor_forward.1} parent=0 // pred_check_branch
    %19 = sbr.rel (0) target = $region9
  $region8: #{ensemble_gaussian_actor_forward.1} parent=0 // pred_region
    _
  $region9: #{ensemble_gaussian_actor_forward.1} parent=0 // pred_fallthru
    _
  // Predicated region
  $region10: #{ensemble_gaussian_actor_forward.1} parent=0 // pred_check
    _
  $region11: #{ensemble_gaussian_actor_forward.1} parent=0 // pred_check_branch
    %21 = sbr.rel (0) target = $region13
  $region12: #{ensemble_gaussian_actor_forward.1} parent=0 // pred_region
    _
  $region13: #{ensemble_gaussian_actor_forward.1} parent=0 // pred_fallthru
    _
  // Predicated region
  $region14: #{ensemble_gaussian_actor_forward.1} parent=0 // pred_check
    _
  $region15: #{ensemble_gaussian_actor_forward.1} parent=0 // pred_check_branch
    %23 = sbr.rel (0) target = $region17
  $region16: #{ensemble_gaussian_actor_forward.1} parent=0 // pred_region
    _
  $region17: #{ensemble_gaussian_actor_forward.1} parent=0 // pred_fallthru
    _
  // Predicated region
  $region18: #{ensemble_gaussian_actor_forward.1} parent=0 // pred_check
    _
  $region19: #{ensemble_gaussian_actor_forward.1} parent=0 // pred_check_branch
    %25 = sbr.rel (0) target = $region21
  $region20: #{ensemble_gaussian_actor_forward.1} parent=0 // pred_region
    _
  $region21: #{ensemble_gaussian_actor_forward.1} parent=0 // pred_fallthru
    _
  // Predicated region
  $region22: #{ensemble_gaussian_actor_forward.1} parent=0 // pred_check
    _
  $region23: #{ensemble_gaussian_actor_forward.1} parent=0 // pred_check_branch
    %27 = sbr.rel (0) target = $region25
  $region24: #{ensemble_gaussian_actor_forward.1} parent=0 // pred_region
    _
  $region25: #{ensemble_gaussian_actor_forward.1} parent=0 // pred_fallthru
    _
  // Predicated region
  $region26: #{ensemble_gaussian_actor_forward.1} parent=0 // pred_check
    _
  $region27: #{ensemble_gaussian_actor_forward.1} parent=0 // pred_check_branch
    %29 = sbr.rel (0) target = $region29
  $region28: #{ensemble_gaussian_actor_forward.1} parent=0 // pred_region
    _
  $region29: #{ensemble_gaussian_actor_forward.1} parent=0 // pred_fallthru
    _
  // Predicated region
  $region30: #{ensemble_gaussian_actor_forward.1} parent=0 // pred_check
    _
  $region31: #{ensemble_gaussian_actor_forward.1} parent=0 // pred_check_branch
    %31 = sbr.rel (0) target = $region33
  $region32: #{ensemble_gaussian_actor_forward.1} parent=0 // pred_region
    _
  $region33: #{ensemble_gaussian_actor_forward.1} parent=0 // pred_fallthru
    _
  // Predicated region
  $region34: #{ensemble_gaussian_actor_forward.1} parent=0 // pred_check
    _
  $region35: #{ensemble_gaussian_actor_forward.1} parent=0 // pred_check_branch
    %33 = sbr.rel (0) target = $region37
  $region36: #{ensemble_gaussian_actor_forward.1} parent=0 // pred_region
    _
  $region37: #{ensemble_gaussian_actor_forward.1} parent=0 // pred_fallthru
    _
  // Predicated region
  $region38: #{ensemble_gaussian_actor_forward.1} parent=0 // pred_check
    _
  $region39: #{ensemble_gaussian_actor_forward.1} parent=0 // pred_check_branch
    %35 = sbr.rel (0) target = $region41
  $region40: #{ensemble_gaussian_actor_forward.1} parent=0 // pred_region
    _
  $region41: #{ensemble_gaussian_actor_forward.1} parent=0 // pred_fallthru
    _
  // Predicated region
  $region42: #{ensemble_gaussian_actor_forward.1} parent=0 // pred_check
    _
  $region43: #{ensemble_gaussian_actor_forward.1} parent=0 // pred_check_branch
    %37 = sbr.rel (0) target = $region45
  $region44: #{ensemble_gaussian_actor_forward.1} parent=0 // pred_region
    _
  $region45: #{ensemble_gaussian_actor_forward.1} parent=0 // pred_fallthru
    _
  %v38 = vld [vmem:[%s0] sm:$0xff]
  %v39 = vld [vmem:[%s0 + $0x8] sm:$0xff]
  %v40 = vld [vmem:[%s1] sm:$0xff]
  %v41 = vld [vmem:[%s1 + $0x8] sm:$0xff]
  %v42 = vld [vmem:[%s1 + $0x10] sm:$0xff]
  %v43 = vld [vmem:[%s1 + $0x18] sm:$0xff]
  %v44 = vld [vmem:[%s1 + $0x20] sm:$0xff]
  %v45 = vld [vmem:[%s1 + $0x28] sm:$0xff]
  %v46 = vld [vmem:[%s1 + $0x30] sm:$0xff]
  %v47 = vld [vmem:[%s1 + $0x38] sm:$0xff]
  %v48 = vld [vmem:[%s1 + $0x40] sm:$0xff]
  %v49 = vld [vmem:[%s1 + $0x48] sm:$0xff]
  %v50 = vld [vmem:[%s1 + $0x50] sm:$0xff]
  %v51 = vld [vmem:[%s1 + $0x58] sm:$0xff]
  %v52 = vld [vmem:[%s1 + $0x60] sm:$0xff]
  %v53 = vld [vmem:[%s1 + $0x68] sm:$0xff]
  %v54 = vld [vmem:[%s1 + $0x70] sm:$0xff]
  %v55 = vld [vmem:[%s1 + $0x78] sm:$0xff]
  %v56 = vld [vmem:[%s1 + $0x80] sm:$0xff]
  %v57 = vld [vmem:[%s1 + $0x88] sm:$0xff]
  %v58 = vld [vmem:[%s1 + $0x90] sm:$0xff]
  %v59 = vld [vmem:[%s1 + $0x98] sm:$0xff]
  %v60 = vld [vmem:[%s1 + $0xa0] sm:$0xff]
  %v61 = vld [vmem:[%s1 + $0xa8] sm:$0xff]
  %v62 = vld [vmem:[%s1 + $0xb0] sm:$0xff]
  %v63 = vld [vmem:[%s1 + $0xb8] sm:$0xff]
  %v64 = vld [vmem:[%s1 + $0xc0] sm:$0xff]
  %v65 = vld [vmem:[%s1 + $0xc8] sm:$0xff]
  %v66 = vld [vmem:[%s1 + $0xd0] sm:$0xff]
  %v67 = vld [vmem:[%s1 + $0xd8] sm:$0xff]
  %v68 = vld [vmem:[%s1 + $0xe0] sm:$0xff]
  %v69 = vld [vmem:[%s1 + $0xe8] sm:$0xff]
  %v70 = vld [vmem:[%s1 + $0xf0] sm:$0xff]
  %v71 = vld [vmem:[%s1 + $0xf8] sm:$0xff]
  %v72 = vld [vmem:[%s1 + $0x100] sm:$0xff]
  %v73 = vld [vmem:[%s1 + $0x108] sm:$0xff]
  %v74 = vld [vmem:[%s1 + $0x110] sm:$0xff]
  %v75 = vld [vmem:[%s1 + $0x118] sm:$0xff]
  %v76 = vld [vmem:[%s1 + $0x120] sm:$0xff]
  %v77 = vld [vmem:[%s1 + $0x128] sm:$0xff]
  %v78 = vld [vmem:[%s1 + $0x130] sm:$0xff]
  %v79 = vld [vmem:[%s1 + $0x138] sm:$0xff]
  %v80 = vld [vmem:[%s1 + $0x140] sm:$0xff]
  %v81 = vld [vmem:[%s1 + $0x148] sm:$0xff]
  %v82 = vld [vmem:[%s1 + $0x150] sm:$0xff]
  %v83 = vld [vmem:[%s1 + $0x158] sm:$0xff]
  %v84 = vld [vmem:[%s1 + $0x160] sm:$0xff]
  %v85 = vld [vmem:[%s1 + $0x168] sm:$0xff]
  %v86 = vld [vmem:[%s1 + $0x170] sm:$0xff]
  %v87 = vld [vmem:[%s1 + $0x178] sm:$0xff]
  %v88 = vld [vmem:[%s1 + $0x180] sm:$0xff]
  %v89 = vld [vmem:[%s1 + $0x188] sm:$0xff]
  %v90 = vld [vmem:[%s1 + $0x190] sm:$0xff]
  %v91 = vld [vmem:[%s1 + $0x198] sm:$0xff]
  %v92 = vld [vmem:[%s1 + $0x1a0] sm:$0xff]
  %v93 = vld [vmem:[%s1 + $0x1a8] sm:$0xff]
  %v94 = vld [vmem:[%s1 + $0x1b0] sm:$0xff]
  %v95 = vld [vmem:[%s1 + $0x1b8] sm:$0xff]
  %v96 = vld [vmem:[%s1 + $0x1c0] sm:$0xff]
  %v97 = vld [vmem:[%s1 + $0x1c8] sm:$0xff]
  %v98 = vld [vmem:[%s1 + $0x1d0] sm:$0xff]
  %v99 = vld [vmem:[%s1 + $0x1d8] sm:$0xff]
  %v100 = vld [vmem:[%s1 + $0x1e0] sm:$0xff]
  %v101 = vld [vmem:[%s1 + $0x1e8] sm:$0xff]
  %v102 = vld [vmem:[%s1 + $0x1f0] sm:$0xff]
  %v103 = vld [vmem:[%s1 + $0x1f8] sm:$0xff]
  %v104 = vld [vmem:[%s1 + $0x200] sm:$0xff]
  %v105 = vld [vmem:[%s1 + $0x208] sm:$0xff]
  %v106 = vld [vmem:[%s1 + $0x210] sm:$0xff]
  %v107 = vld [vmem:[%s1 + $0x218] sm:$0xff]
  %v108 = vld [vmem:[%s1 + $0x220] sm:$0xff]
  %v109 = vld [vmem:[%s1 + $0x228] sm:$0xff]
  %v110 = vld [vmem:[%s1 + $0x230] sm:$0xff]
  %v111 = vld [vmem:[%s1 + $0x238] sm:$0xff]
  %v112 = vld [vmem:[%s1 + $0x240] sm:$0xff]
  %v113 = vld [vmem:[%s1 + $0x248] sm:$0xff]
  %v114 = vld [vmem:[%s1 + $0x250] sm:$0xff]
  %v115 = vld [vmem:[%s1 + $0x258] sm:$0xff]
  %v116 = vld [vmem:[%s1 + $0x260] sm:$0xff]
  %v117 = vld [vmem:[%s1 + $0x268] sm:$0xff]
  %v118 = vld [vmem:[%s1 + $0x270] sm:$0xff]
  %v119 = vld [vmem:[%s1 + $0x278] sm:$0xff]
  %v120 = vld [vmem:[%s1 + $0x280] sm:$0xff]
  %v121 = vld [vmem:[%s1 + $0x288] sm:$0xff]
  %v122 = vld [vmem:[%s1 + $0x290] sm:$0xff]
  %v123 = vld [vmem:[%s1 + $0x298] sm:$0xff]
  %v124 = vld [vmem:[%s1 + $0x2a0] sm:$0xff]
  %v125 = vld [vmem:[%s1 + $0x2a8] sm:$0xff]
  %v126 = vld [vmem:[%s1 + $0x2b0] sm:$0xff]
  %v127 = vld [vmem:[%s1 + $0x2b8] sm:$0xff]
  %v128 = vld [vmem:[%s1 + $0x2c0] sm:$0xff]
  %v129 = vld [vmem:[%s1 + $0x2c8] sm:$0xff]
  %v130 = vld [vmem:[%s1 + $0x2d0] sm:$0xff]
  %v131 = vld [vmem:[%s1 + $0x2d8] sm:$0xff]
  %v132 = vld [vmem:[%s1 + $0x2e0] sm:$0xff]
  %v133 = vld [vmem:[%s1 + $0x2e8] sm:$0xff]
  %v134 = vld [vmem:[%s1 + $0x2f0] sm:$0xff]
  %v135 = vld [vmem:[%s1 + $0x2f8] sm:$0xff]
  %v136 = vld [vmem:[%s1 + $0x300] sm:$0xff]
  %v137 = vld [vmem:[%s1 + $0x308] sm:$0xff]
  %v138 = vld [vmem:[%s1 + $0x310] sm:$0xff]
  %v139 = vld [vmem:[%s1 + $0x318] sm:$0xff]
  %v140 = vld [vmem:[%s1 + $0x320] sm:$0xff]
  %v141 = vld [vmem:[%s1 + $0x328] sm:$0xff]
  %v142 = vld [vmem:[%s1 + $0x330] sm:$0xff]
  %v143 = vld [vmem:[%s1 + $0x338] sm:$0xff]
  %v144 = vld [vmem:[%s1 + $0x340] sm:$0xff]
  %v145 = vld [vmem:[%s1 + $0x348] sm:$0xff]
  %v146 = vld [vmem:[%s1 + $0x350] sm:$0xff]
  %v147 = vld [vmem:[%s1 + $0x358] sm:$0xff]
  %v148 = vld [vmem:[%s1 + $0x360] sm:$0xff]
  %v149 = vld [vmem:[%s1 + $0x368] sm:$0xff]
  %v150 = vld [vmem:[%s1 + $0x370] sm:$0xff]
  %v151 = vld [vmem:[%s1 + $0x378] sm:$0xff]
  %v152 = vld [vmem:[%s1 + $0x380] sm:$0xff]
  %v153 = vld [vmem:[%s1 + $0x388] sm:$0xff]
  %v154 = vld [vmem:[%s1 + $0x390] sm:$0xff]
  %v155 = vld [vmem:[%s1 + $0x398] sm:$0xff]
  %v156 = vld [vmem:[%s1 + $0x3a0] sm:$0xff]
  %v157 = vld [vmem:[%s1 + $0x3a8] sm:$0xff]
  %v158 = vld [vmem:[%s1 + $0x3b0] sm:$0xff]
  %v159 = vld [vmem:[%s1 + $0x3b8] sm:$0xff]
  %v160 = vld [vmem:[%s1 + $0x3c0] sm:$0xff]
  %v161 = vld [vmem:[%s1 + $0x3c8] sm:$0xff]
  %v162 = vld [vmem:[%s1 + $0x3d0] sm:$0xff]
  %v163 = vld [vmem:[%s1 + $0x3d8] sm:$0xff]
  %v164 = vld [vmem:[%s1 + $0x3e0] sm:$0xff]
  %v165 = vld [vmem:[%s1 + $0x3e8] sm:$0xff]
  %v166 = vld [vmem:[%s1 + $0x3f0] sm:$0xff]
  %v167 = vld [vmem:[%s1 + $0x3f8] sm:$0xff]
  %v168 = vld [vmem:[%s2] sm:$0x1]
  %v170 = vperm.slane %v168, 0
  %174 = vst [vmem:[#allocation1] ss:$4 sm:$0xff] %v38
  %s175 = scalar_lea.vmem [#allocation1], 32
  %176 = vst [vmem:[%s175] ss:$4 sm:$0xff] %v39
  %v177 = vld.sshfl [vmem:[#allocation1] sm:$0xff pattern:$0x73625140]
  %v178 = vld.sshfl [vmem:[#allocation1 + $0x8] sm:$0xff pattern:$0x73625140]
  %v179 = vld.sshfl [vmem:[#allocation1 + $0x10] sm:$0xff pattern:$0x73625140]
  %v180 = vld.sshfl [vmem:[#allocation1 + $0x18] sm:$0xff pattern:$0x73625140]
  %v181 = vld.sshfl [vmem:[#allocation1 + $0x20] sm:$0xff pattern:$0x73625140]
  %v182 = vld.sshfl [vmem:[#allocation1 + $0x28] sm:$0xff pattern:$0x73625140]
  %v183 = vld.sshfl [vmem:[#allocation1 + $0x30] sm:$0xff pattern:$0x73625140]
  %v184 = vld.sshfl [vmem:[#allocation1 + $0x38] sm:$0xff pattern:$0x73625140]
  %193 = vmatpush.msra.mxu0 %v55
  %194 = vmatpush.msra.mxu0 %v54
  %195 = vmatpush.msra.mxu0 %v53
  %196 = vmatpush.msra.mxu0 %v52
  %197 = vmatpush.msra.mxu0 %v51
  %198 = vmatpush.msra.mxu0 %v50
  %199 = vmatpush.msra.mxu0 %v49
  %200 = vmatpush.msra.mxu0 %v48
  %201 = vmatpush.msra.mxu0 %v47
  %202 = vmatpush.msra.mxu0 %v46
  %203 = vmatpush.msra.mxu0 %v45
  %204 = vmatpush.msra.mxu0 %v44
  %205 = vmatpush.msra.mxu0 %v43
  %206 = vmatpush.msra.mxu0 %v42
  %207 = vmatpush.msra.mxu0 %v41
  %208 = vmatpush.msra.mxu0 %v40
  %209 = vmatmul.f32.gmra.mxu0 %v177
  %v210 = vpop.f32.mrf.mxu0
  %v211 = vadd.f32 %v170, %v210
  %212 = vdwg.mxu0
  %213 = vmatpush.msra.mxu0 %v71
  %214 = vmatpush.msra.mxu0 %v70
  %215 = vmatpush.msra.mxu0 %v69
  %216 = vmatpush.msra.mxu0 %v68
  %217 = vmatpush.msra.mxu0 %v67
  %218 = vmatpush.msra.mxu0 %v66
  %219 = vmatpush.msra.mxu0 %v65
  %220 = vmatpush.msra.mxu0 %v64
  %221 = vmatpush.msra.mxu0 %v63
  %222 = vmatpush.msra.mxu0 %v62
  %223 = vmatpush.msra.mxu0 %v61
  %224 = vmatpush.msra.mxu0 %v60
  %225 = vmatpush.msra.mxu0 %v59
  %226 = vmatpush.msra.mxu0 %v58
  %227 = vmatpush.msra.mxu0 %v57
  %228 = vmatpush.msra.mxu0 %v56
  %229 = vmatmul.f32.gmra.mxu0 %v178
  %v230 = vpop.f32.mrf.mxu0
  %v231 = vadd.f32 %v211, %v230
  %232 = vdwg.mxu0
  %233 = vmatpush.msra.mxu0 %v87
  %234 = vmatpush.msra.mxu0 %v86
  %235 = vmatpush.msra.mxu0 %v85
  %236 = vmatpush.msra.mxu0 %v84
  %237 = vmatpush.msra.mxu0 %v83
  %238 = vmatpush.msra.mxu0 %v82
  %239 = vmatpush.msra.mxu0 %v81
  %240 = vmatpush.msra.mxu0 %v80
  %241 = vmatpush.msra.mxu0 %v79
  %242 = vmatpush.msra.mxu0 %v78
  %243 = vmatpush.msra.mxu0 %v77
  %244 = vmatpush.msra.mxu0 %v76
  %245 = vmatpush.msra.mxu0 %v75
  %246 = vmatpush.msra.mxu0 %v74
  %247 = vmatpush.msra.mxu0 %v73
  %248 = vmatpush.msra.mxu0 %v72
  %249 = vmatmul.f32.gmra.mxu0 %v179
  %v250 = vpop.f32.mrf.mxu0
  %v251 = vadd.f32 %v231, %v250
  %252 = vdwg.mxu0
  %253 = vmatpush.msra.mxu0 %v103
  %254 = vmatpush.msra.mxu0 %v102
  %255 = vmatpush.msra.mxu0 %v101
  %256 = vmatpush.msra.mxu0 %v100
  %257 = vmatpush.msra.mxu0 %v99
  %258 = vmatpush.msra.mxu0 %v98
  %259 = vmatpush.msra.mxu0 %v97
  %260 = vmatpush.msra.mxu0 %v96
  %261 = vmatpush.msra.mxu0 %v95
  %262 = vmatpush.msra.mxu0 %v94
  %263 = vmatpush.msra.mxu0 %v93
  %264 = vmatpush.msra.mxu0 %v92
  %265 = vmatpush.msra.mxu0 %v91
  %266 = vmatpush.msra.mxu0 %v90
  %267 = vmatpush.msra.mxu0 %v89
  %268 = vmatpush.msra.mxu0 %v88
  %269 = vmatmul.f32.gmra.mxu0 %v180
  %v270 = vpop.f32.mrf.mxu0
  %v271 = vadd.f32 %v251, %v270
  %272 = vdwg.mxu0
  %273 = vmatpush.msra.mxu0 %v119
  %274 = vmatpush.msra.mxu0 %v118
  %275 = vmatpush.msra.mxu0 %v117
  %276 = vmatpush.msra.mxu0 %v116
  %277 = vmatpush.msra.mxu0 %v115
  %278 = vmatpush.msra.mxu0 %v114
  %279 = vmatpush.msra.mxu0 %v113
  %280 = vmatpush.msra.mxu0 %v112
  %281 = vmatpush.msra.mxu0 %v111
  %282 = vmatpush.msra.mxu0 %v110
  %283 = vmatpush.msra.mxu0 %v109
  %284 = vmatpush.msra.mxu0 %v108
  %285 = vmatpush.msra.mxu0 %v107
  %286 = vmatpush.msra.mxu0 %v106
  %287 = vmatpush.msra.mxu0 %v105
  %288 = vmatpush.msra.mxu0 %v104
  %289 = vmatmul.f32.gmra.mxu0 %v181
  %v290 = vpop.f32.mrf.mxu0
  %v291 = vadd.f32 %v271, %v290
  %292 = vdwg.mxu0
  %293 = vmatpush.msra.mxu0 %v135
  %294 = vmatpush.msra.mxu0 %v134
  %295 = vmatpush.msra.mxu0 %v133
  %296 = vmatpush.msra.mxu0 %v132
  %297 = vmatpush.msra.mxu0 %v131
  %298 = vmatpush.msra.mxu0 %v130
  %299 = vmatpush.msra.mxu0 %v129
  %300 = vmatpush.msra.mxu0 %v128
  %301 = vmatpush.msra.mxu0 %v127
  %302 = vmatpush.msra.mxu0 %v126
  %303 = vmatpush.msra.mxu0 %v125
  %304 = vmatpush.msra.mxu0 %v124
  %305 = vmatpush.msra.mxu0 %v123
  %306 = vmatpush.msra.mxu0 %v122
  %307 = vmatpush.msra.mxu0 %v121
  %308 = vmatpush.msra.mxu0 %v120
  %309 = vmatmul.f32.gmra.mxu0 %v182
  %v310 = vpop.f32.mrf.mxu0
  %v311 = vadd.f32 %v291, %v310
  %312 = vdwg.mxu0
  %313 = vmatpush.msra.mxu0 %v151
  %314 = vmatpush.msra.mxu0 %v150
  %315 = vmatpush.msra.mxu0 %v149
  %316 = vmatpush.msra.mxu0 %v148
  %317 = vmatpush.msra.mxu0 %v147
  %318 = vmatpush.msra.mxu0 %v146
  %319 = vmatpush.msra.mxu0 %v145
  %320 = vmatpush.msra.mxu0 %v144
  %321 = vmatpush.msra.mxu0 %v143
  %322 = vmatpush.msra.mxu0 %v142
  %323 = vmatpush.msra.mxu0 %v141
  %324 = vmatpush.msra.mxu0 %v140
  %325 = vmatpush.msra.mxu0 %v139
  %326 = vmatpush.msra.mxu0 %v138
  %327 = vmatpush.msra.mxu0 %v137
  %328 = vmatpush.msra.mxu0 %v136
  %329 = vmatmul.f32.gmra.mxu0 %v183
  %v330 = vpop.f32.mrf.mxu0
  %v331 = vadd.f32 %v311, %v330
  %332 = vdwg.mxu0
  %333 = vmatpush.msra.mxu0 %v167
  %334 = vmatpush.msra.mxu0 %v166
  %335 = vmatpush.msra.mxu0 %v165
  %336 = vmatpush.msra.mxu0 %v164
  %337 = vmatpush.msra.mxu0 %v163
  %338 = vmatpush.msra.mxu0 %v162
  %339 = vmatpush.msra.mxu0 %v161
  %340 = vmatpush.msra.mxu0 %v160
  %341 = vmatpush.msra.mxu0 %v159
  %342 = vmatpush.msra.mxu0 %v158
  %343 = vmatpush.msra.mxu0 %v157
  %344 = vmatpush.msra.mxu0 %v156
  %345 = vmatpush.msra.mxu0 %v155
  %346 = vmatpush.msra.mxu0 %v154
  %347 = vmatpush.msra.mxu0 %v153
  %348 = vmatpush.msra.mxu0 %v152
  %349 = vmatmul.f32.gmra.mxu0 %v184
  %v350 = vpop.f32.mrf.mxu0
  %v351 = vadd.f32 %v331, %v350
  %352 = vdwg.mxu0
  %vm353 = vcmask 254976
  %v354 = vsel %vm353, %v351, 0.0
  %355 = vadd.xlane.f32.xlu0 %v354
  %v356 = vpop.xlane.xlu0 %355
  %v357 = vrcp.pop 32.0
  %v358 = vmul.f32 32.0, %v357
  %v359 = vsub.f32 1.0, %v358
  %v360 = vmul.f32 %v357, %v359
  %v361 = vadd.f32 %v357, %v360
  %vm362 = vweird.f32 %v357
  %v363 = vsel %vm362, %v357, %v361
  %v364 = vmul.f32 %v356, %v363
  %v365 = vsub.f32 %v351, %v364
  %v366 = vmul.f32 %v365, %v365
  %v367 = vsel %vm353, %v366, 0.0
  %368 = vadd.xlane.f32.xlu0 %v367
  %v369 = vpop.xlane.xlu0 %368
  %v370 = vmul.f32 %v369, %v363
  %v371 = vadd.f32 %v370, 1e-05
  %v372 = vrsqrt.pop %v371
  %v373 = vmul.f32 %v372, %v371
  %v374 = vmul.f32 %v373, %v372
  %v375 = vmul.f32 0.5, %v374
  %v376 = vsub.f32 1.5, %v375
  %v377 = vmul.f32 %v372, %v376
  %vm378 = vweird.f32 %v371
  %vm379 = vweird.f32 %v372
  %vm380 = vmor %vm378, %vm379
  %v381 = vsel %vm380, %v372, %v377
  %v382 = vmul.f32 %v365, %v381
  %v383 = vld [vmem:[%s3] sm:$0x1]
  %v385 = vperm.slane %v383, 0
  %v387 = vmul.f32 %v382, %v385
  %v388 = vld [vmem:[%s4] sm:$0x1]
  %v390 = vperm.slane %v388, 0
  %v392 = vadd.f32 %v387, %v390
  %v393 = vtanh.pop %v392
  %v394 = vld [vmem:[%s5] sm:$0xff]
  %v395 = vld [vmem:[%s5 + $0x8] sm:$0xff]
  %v396 = vld [vmem:[%s5 + $0x10] sm:$0xff]
  %v397 = vld [vmem:[%s5 + $0x18] sm:$0xff]
  %v398 = vld [vmem:[%s6] sm:$0x1]
  %v400 = vperm.slane %v398, 0
  %vm402 = vcmask 261120
  %v404 = vsel %vm402, %v393, 0
  %406 = vmatpush.msra.mxu0 0.0
  %407 = vmatpush.msra.mxu0 0.0
  %408 = vmatpush.msra.mxu0 0.0
  %409 = vmatpush.msra.mxu0 0.0
  %410 = vmatpush.msra.mxu0 0.0
  %411 = vmatpush.msra.mxu0 0.0
  %412 = vmatpush.msra.mxu0 0.0
  %413 = vmatpush.msra.mxu0 0.0
  %414 = vmatpush.msra.mxu0 0.0
  %415 = vmatpush.msra.mxu0 0.0
  %416 = vmatpush.msra.mxu0 0.0
  %417 = vmatpush.msra.mxu0 0.0
  %418 = vmatpush.msra.mxu0 %v397
  %419 = vmatpush.msra.mxu0 %v396
  %420 = vmatpush.msra.mxu0 %v395
  %421 = vmatpush.msra.mxu0 %v394
  %422 = vmatmul.f32.gmra.mxu0 %v404
  %v423 = vpop.f32.mrf.mxu0
  %v424 = vadd.f32 %v400, %v423
  %425 = vdwg.mxu0
  %v426 = vmax.f32 %v424, 0.0
  %v427 = vld [vmem:[%s7] sm:$0xff]
  %v428 = vld [vmem:[%s7 + $0x8] sm:$0xff]
  %v429 = vld [vmem:[%s7 + $0x10] sm:$0xff]
  %v430 = vld [vmem:[%s7 + $0x18] sm:$0xff]
  %v431 = vld [vmem:[%s7 + $0x20] sm:$0xff]
  %v432 = vld [vmem:[%s7 + $0x28] sm:$0xff]
  %v433 = vld [vmem:[%s7 + $0x30] sm:$0xff]
  %v434 = vld [vmem:[%s7 + $0x38] sm:$0xff]
  %v435 = vld [vmem:[%s8] sm:$0x1]
  %v437 = vperm.slane %v435, 0
  %vm439 = vcmask 523264
  %v441 = vsel %vm439, %v426, 0
  %443 = vmatpush.msra.mxu0 0.0
  %444 = vmatpush.msra.mxu0 0.0
  %445 = vmatpush.msra.mxu0 0.0
  %446 = vmatpush.msra.mxu0 0.0
  %447 = vmatpush.msra.mxu0 0.0
  %448 = vmatpush.msra.mxu0 0.0
  %449 = vmatpush.msra.mxu0 0.0
  %450 = vmatpush.msra.mxu0 0.0
  %451 = vmatpush.msra.mxu0 %v434
  %452 = vmatpush.msra.mxu0 %v433
  %453 = vmatpush.msra.mxu0 %v432
  %454 = vmatpush.msra.mxu0 %v431
  %455 = vmatpush.msra.mxu0 %v430
  %456 = vmatpush.msra.mxu0 %v429
  %457 = vmatpush.msra.mxu0 %v428
  %458 = vmatpush.msra.mxu0 %v427
  %459 = vmatmul.f32.gmra.mxu0 %v441
  %v460 = vpop.f32.mrf.mxu0
  %v461 = vadd.f32 %v437, %v460
  %462 = vdwg.mxu0
  %v463 = vmax.f32 %v461, 0.0
  %v464 = vld [vmem:[%s9] sm:$0xff]
  %v465 = vld [vmem:[%s9 + $0x8] sm:$0xff]
  %v466 = vld [vmem:[%s9 + $0x10] sm:$0xff]
  %v467 = vld [vmem:[%s9 + $0x18] sm:$0xff]
  %v468 = vld [vmem:[%s9 + $0x20] sm:$0xff]
  %v469 = vld [vmem:[%s9 + $0x28] sm:$0xff]
  %v470 = vld [vmem:[%s9 + $0x30] sm:$0xff]
  %v471 = vld [vmem:[%s9 + $0x38] sm:$0xff]
  %v472 = vld [vmem:[%s10] sm:$0x1]
  %v474 = vperm.slane %v472, 0
  %v477 = vsel %vm439, %v463, 0
  %479 = vmatpush.msra.mxu0 0.0
  %480 = vmatpush.msra.mxu0 0.0
  %481 = vmatpush.msra.mxu0 0.0
  %482 = vmatpush.msra.mxu0 0.0
  %483 = vmatpush.msra.mxu0 0.0
  %484 = vmatpush.msra.mxu0 0.0
  %485 = vmatpush.msra.mxu0 0.0
  %486 = vmatpush.msra.mxu0 0.0
  %487 = vmatpush.msra.mxu0 %v471
  %488 = vmatpush.msra.mxu0 %v470
  %489 = vmatpush.msra.mxu0 %v469
  %490 = vmatpush.msra.mxu0 %v468
  %491 = vmatpush.msra.mxu0 %v467
  %492 = vmatpush.msra.mxu0 %v466
  %493 = vmatpush.msra.mxu0 %v465
  %494 = vmatpush.msra.mxu0 %v464
  %495 = vmatmul.f32.gmra.mxu0 %v477
  %v496 = vpop.f32.mrf.mxu0
  %v497 = vadd.f32 %v474, %v496
  %498 = vdwg.mxu0
  %v499 = vlaneseq
  %v500 = vand.u32 %v499, 127
  %vm501 = vcmp.lt.s32.totalorder %v500, 8
  %v502 = vtanh.pop %v497
  %v503 = vmul.f32 %v497, 1.442695
  %v504 = vpow.pop %v503
  %v505 = vsel %vm501, %v502, %v504
  %506 = vst [vmem:[%s11] sm:$0x3] %v505
  // Predicated region
  $region46: #{ensemble_gaussian_actor_forward.1} parent=0 // pred_check
    _
  $region47: #{ensemble_gaussian_actor_forward.1} parent=0 // pred_check_branch
    %508 = sbr.rel (0) target = $region49
  $region48: #{ensemble_gaussian_actor_forward.1} parent=0 // pred_region
    _
  $region49: #{ensemble_gaussian_actor_forward.1} parent=0 // pred_fallthru
    _
  // Predicated region
  $region50: #{ensemble_gaussian_actor_forward.1} parent=0 // pred_check
    _
  $region51: #{ensemble_gaussian_actor_forward.1} parent=0 // pred_check_branch
    %510 = sbr.rel (0) target = $region53
  $region52: #{ensemble_gaussian_actor_forward.1} parent=0 // pred_region
    _
  $region53: #{ensemble_gaussian_actor_forward.1} parent=0 // pred_fallthru
    _

</llo_original>
